<compile_context>
chip_gen: v5e
topology: v5e:2x2
jax: 0.10.0
libtpu: 0.0.40
codegen_flags: <defaults>
</compile_context>

<pallas_src>
import functools

import jax
import jax.numpy as jnp
from jax.experimental import pallas as pl
from jax.experimental.pallas import tpu as pltpu

N_STATES = 5
N_STATES_PAD = 8      # 5 -> 8: layout-friendly K for fc1 (zero padded)
N_ACTIONS = 4
HIDDEN = 128          # also the padded output width (lane-dense stores)


def _mlp_kernel(x_ref, w1_ref, b1_ref, w2_ref, b2_ref, w3_ref, b3_ref, out_ref):
    # One (TB, 8) batch tile per grid step; weights stay VMEM-resident across
    # steps via constant index_maps (no re-DMA, no per-step casts).
    x = x_ref[...]                                                    # (TB, 8) f32

    # fc1 + ReLU — f32 (K=8: negligible FLOPs, keeps input precision).
    h1 = jnp.dot(x, w1_ref[...], preferred_element_type=jnp.float32)  # (TB, 128)
    h1 = jnp.maximum(h1 + b1_ref[...], 0.0)

    # fc2 + ReLU — bf16 MXU operands (w2 pre-cast), f32 accumulate.
    h2 = jnp.dot(h1.astype(jnp.bfloat16), w2_ref[...],
                 preferred_element_type=jnp.float32)                  # (TB, 128)
    h2 = jnp.maximum(h2 + b2_ref[...], 0.0)

    # out — padded to 128 lanes (cols 4..127 of w3/b3 are zero), no activation.
    y = jnp.dot(h2.astype(jnp.bfloat16), w3_ref[...],
                preferred_element_type=jnp.float32)                   # (TB, 128)
    out_ref[...] = (y + b3_ref[...]).astype(out_ref.dtype)


def _round_up(n, m):
    return ((n + m - 1) // m) * m


def _default_block_cap():
    """Batch-tile cap per TPU generation.

    v5e/v6e: single TensorCore -> one big step (grid loop is serial, each step
    costs ~0.35us).  v7x: 2 TCs -> smaller tiles so grid>=2 shards both cores."""
    try:
        kind = jax.devices()[0].device_kind.lower()
    except Exception:
        return 1024
    return 256 if "7" in kind else 1024


@functools.partial(jax.jit, static_argnames=("block_b",))
def net_forward(x, kparams, *, block_b=None):
    """x: (B, N_STATES) float32. kparams: output of prepare_params()."""
    B = x.shape[0]
    cap = block_b if block_b is not None else _default_block_cap()
    # Tile: up to `cap` rows, but never more than the (8-rounded) batch itself
    # so tiny act() calls stay a single small step.
    tb = min(cap, _round_up(max(B, 1), 8))
    b_pad = _round_up(B, tb)

    # Host-boundary padding of x only (weights pre-padded once at init):
    # batch -> multiple of tb, features 5 -> 8.  jnp.pad fuses in XLA.
    x_p = jnp.pad(x, ((0, b_pad - B), (0, N_STATES_PAD - N_STATES)))

    const = lambda shape: pl.BlockSpec(shape, lambda i: (0, 0))

    out = pl.pallas_call(
        _mlp_kernel,
        out_shape=jax.ShapeDtypeStruct((b_pad, HIDDEN), jnp.float32),
        grid=(b_pad // tb,),
        in_specs=[
            pl.BlockSpec((tb, N_STATES_PAD), lambda i: (i, 0)),   # x: batch tiled
            const((N_STATES_PAD, HIDDEN)), const((1, HIDDEN)),    # fc1 (resident, f32)
            const((HIDDEN, HIDDEN)),       const((1, HIDDEN)),    # fc2 (resident, bf16 w)
            const((HIDDEN, HIDDEN)),       const((1, HIDDEN)),    # out (resident, padded)
        ],
        out_specs=pl.BlockSpec((tb, HIDDEN), lambda i: (i, 0)),   # lane-dense store
        compiler_params=pltpu.CompilerParams(
            # batch axis is embarrassingly parallel -> shards across 2 TCs on v7x
            dimension_semantics=("parallel",),
            # <= ~3.5 MiB live at tb=1024 (x/out double-buffers + f32/bf16
            # intermediates + ~70 KB resident weights); keep budget explicit
            # so the same code is safe on v7x's 64 MiB VMEM.
            vmem_limit_bytes=16 << 20,
        ),
    )(x_p, kparams["w1"], kparams["b1"], kparams["w2"], kparams["b2"],
      kparams["w3"], kparams["b3"])

    return out[:B, :N_ACTIONS]


def prepare_params(params):
    """One-time host-side pad/cast into kernel layout (outside the jit path).

    w1: (5,128) f32 -> (8,128) f32 (zero rows);
    w2: (128,128) f32 -> bf16;
    w3: (128,4) f32 -> (128,128) bf16 (zero cols); b3 -> (1,128) f32 (zero cols)."""
    w1 = jnp.pad(params["w1"], ((0, N_STATES_PAD - N_STATES), (0, 0)))
    w2 = params["w2"].astype(jnp.bfloat16)
    w3 = jnp.pad(params["w3"].astype(jnp.bfloat16),
                 ((0, 0), (0, HIDDEN - N_ACTIONS)))
    b3 = jnp.pad(params["b3"], ((0, 0), (0, HIDDEN - N_ACTIONS)))
    return {"w1": w1, "b1": params["b1"], "w2": w2, "b2": params["b2"],
            "w3": w3, "b3": b3}


def init_params(key):
    """Synthetic init mirroring the PyTorch module.

    PyTorch: weight ~ Normal(0, 0.1); bias ~ uniform(-1/sqrt(fan_in), +).
    Weights stored transposed: (in_features, out_features), f32."""
    ks = jax.random.split(key, 6)

    def linear(kw, kb, fan_in, fan_out):
        w = 0.1 * jax.random.normal(kw, (fan_in, fan_out), dtype=jnp.float32)
        bound = 1.0 / jnp.sqrt(jnp.float32(fan_in))
        b = jax.random.uniform(kb, (1, fan_out), dtype=jnp.float32,
                               minval=-bound, maxval=bound)
        return w, b

    w1, b1 = linear(ks[0], ks[1], N_STATES, HIDDEN)
    w2, b2 = linear(ks[2], ks[3], HIDDEN, HIDDEN)
    w3, b3 = linear(ks[4], ks[5], HIDDEN, N_ACTIONS)
    return {"w1": w1, "b1": b1, "w2": w2, "b2": b2, "w3": w3, "b3": b3}


def net_forward_ref(x, params):
    h1 = jnp.maximum(x @ params["w1"] + params["b1"], 0.0)
    h2 = jnp.maximum(h1 @ params["w2"] + params["b2"], 0.0)
    return h2 @ params["w3"] + params["b3"]


if __name__ == "__main__":
    key = jax.random.PRNGKey(0)
    k_params, k_small, k_big = jax.random.split(key, 3)
    params = init_params(k_params)
    kparams = prepare_params(params)          # one-time pad/cast, outside jit

    # fc2/out use bf16 MXU operands (f32 accumulate) -> relax tolerance vs f32.
    TOL = dict(atol=2e-2, rtol=2e-2)

    # Small "act()" batch: single tiny grid step (tb rounds down to the batch).
    x_small = jax.random.normal(k_small, (8, N_STATES), dtype=jnp.float32)
    out_small = jax.block_until_ready(net_forward(x_small, kparams))
    ref_small = net_forward_ref(x_small, params)
    assert out_small.shape == (8, N_ACTIONS), out_small.shape
    assert jnp.allclose(out_small, ref_small, **TOL), "small-batch mismatch"

    # Replay/"learn()" batch: exercises batch padding + (on v7x) multi-step
    # grid across both TensorCores; on v5e/v6e it collapses to a single step.
    x_big = jax.random.normal(k_big, (1000, N_STATES), dtype=jnp.float32)
    out_big = jax.block_until_ready(net_forward(x_big, kparams))
    ref_big = net_forward_ref(x_big, params)
    assert out_big.shape == (1000, N_ACTIONS), out_big.shape
    assert jnp.allclose(out_big, ref_big, **TOL), "large-batch mismatch"

    print("KERNEL_OK")
</pallas_src>

<mosaic_0001>
module attributes {stable_mosaic.version = 11 : i64} {
  func.func @_mlp_kernel(%arg0: i32, %arg1: memref<8x8xf32, #tpu.memory_space<vmem>>, %arg2: memref<8x128xf32, #tpu.memory_space<vmem>>, %arg3: memref<1x128xf32, #tpu.memory_space<vmem>>, %arg4: memref<128x128xbf16, #tpu.memory_space<vmem>>, %arg5: memref<1x128xf32, #tpu.memory_space<vmem>>, %arg6: memref<128x128xbf16, #tpu.memory_space<vmem>>, %arg7: memref<1x128xf32, #tpu.memory_space<vmem>>, %arg8: memref<8x128xf32, #tpu.memory_space<vmem>>) attributes {dimension_semantics = [#tpu.dimension_semantics<parallel>], iteration_bounds = array<i64: 1>, scalar_prefetch = 0 : i64, scratch_operands = 0 : i64, tpu.core_type = #tpu.core_type<tc>, window_params = [{transform_indices = @transform_0, window_bounds = array<i64: 8, 8>}, {pipeline_mode = #tpu.pipeline_mode<synchronous>, transform_indices = @transform_1, window_bounds = array<i64: 8, 128>}, {pipeline_mode = #tpu.pipeline_mode<synchronous>, transform_indices = @transform_2, window_bounds = array<i64: 1, 128>}, {pipeline_mode = #tpu.pipeline_mode<synchronous>, transform_indices = @transform_3, window_bounds = array<i64: 128, 128>}, {pipeline_mode = #tpu.pipeline_mode<synchronous>, transform_indices = @transform_4, window_bounds = array<i64: 1, 128>}, {pipeline_mode = #tpu.pipeline_mode<synchronous>, transform_indices = @transform_5, window_bounds = array<i64: 128, 128>}, {pipeline_mode = #tpu.pipeline_mode<synchronous>, transform_indices = @transform_6, window_bounds = array<i64: 1, 128>}, {transform_indices = @transform_7, window_bounds = array<i64: 8, 128>}]} {
    %c0 = arith.constant 0 : index
    %c0_0 = arith.constant 0 : index
    %0 = vector.load %arg1[%c0, %c0_0] : memref<8x8xf32, #tpu.memory_space<vmem>>, vector<8x8xf32>
    %c0_1 = arith.constant 0 : index
    %c0_2 = arith.constant 0 : index
    %1 = vector.load %arg2[%c0_1, %c0_2] : memref<8x128xf32, #tpu.memory_space<vmem>>, vector<8x128xf32>
    %cst = arith.constant dense<0.000000e+00> : vector<8x128xf32>
    %2 = tpu.matmul %0, %1, %cst {dimension_numbers = #tpu.dot_dimension_numbers<[1], [0], [0], [1], [0, 0, 1, 1], [], []>} : vector<8x8xf32>, vector<8x128xf32>, vector<8x128xf32> -> vector<8x128xf32>
    %c0_3 = arith.constant 0 : index
    %c0_4 = arith.constant 0 : index
    %3 = vector.load %arg3[%c0_3, %c0_4] : memref<1x128xf32, #tpu.memory_space<vmem>>, vector<1x128xf32>
    %4 = vector.broadcast %3 : vector<1x128xf32> to vector<8x128xf32>
    %5 = arith.addf %2, %4 : vector<8x128xf32>
    %cst_5 = arith.constant 0.000000e+00 : f32
    %6 = vector.broadcast %cst_5 : f32 to vector<8x128xf32>
    %7 = arith.maximumf %5, %6 : vector<8x128xf32>
    %8 = arith.truncf %7 : vector<8x128xf32> to vector<8x128xbf16>
    %c0_6 = arith.constant 0 : index
    %c0_7 = arith.constant 0 : index
    %9 = vector.load %arg4[%c0_6, %c0_7] : memref<128x128xbf16, #tpu.memory_space<vmem>>, vector<128x128xbf16>
    %cst_8 = arith.constant dense<0.000000e+00> : vector<8x128xf32>
    %10 = tpu.matmul %8, %9, %cst_8 {dimension_numbers = #tpu.dot_dimension_numbers<[1], [0], [0], [1], [0, 0, 1, 1], [], []>} : vector<8x128xbf16>, vector<128x128xbf16>, vector<8x128xf32> -> vector<8x128xf32>
    %c0_9 = arith.constant 0 : index
    %c0_10 = arith.constant 0 : index
    %11 = vector.load %arg5[%c0_9, %c0_10] : memref<1x128xf32, #tpu.memory_space<vmem>>, vector<1x128xf32>
    %12 = vector.broadcast %11 : vector<1x128xf32> to vector<8x128xf32>
    %13 = arith.addf %10, %12 : vector<8x128xf32>
    %cst_11 = arith.constant 0.000000e+00 : f32
    %14 = vector.broadcast %cst_11 : f32 to vector<8x128xf32>
    %15 = arith.maximumf %13, %14 : vector<8x128xf32>
    %16 = arith.truncf %15 : vector<8x128xf32> to vector<8x128xbf16>
    %c0_12 = arith.constant 0 : index
    %c0_13 = arith.constant 0 : index
    %17 = vector.load %arg6[%c0_12, %c0_13] : memref<128x128xbf16, #tpu.memory_space<vmem>>, vector<128x128xbf16>
    %cst_14 = arith.constant dense<0.000000e+00> : vector<8x128xf32>
    %18 = tpu.matmul %16, %17, %cst_14 {dimension_numbers = #tpu.dot_dimension_numbers<[1], [0], [0], [1], [0, 0, 1, 1], [], []>} : vector<8x128xbf16>, vector<128x128xbf16>, vector<8x128xf32> -> vector<8x128xf32>
    %c0_15 = arith.constant 0 : index
    %c0_16 = arith.constant 0 : index
    %19 = vector.load %arg7[%c0_15, %c0_16] : memref<1x128xf32, #tpu.memory_space<vmem>>, vector<1x128xf32>
    %20 = vector.broadcast %19 : vector<1x128xf32> to vector<8x128xf32>
    %21 = arith.addf %18, %20 : vector<8x128xf32>
    %c0_17 = arith.constant 0 : index
    %c0_18 = arith.constant 0 : index
    %22 = vector.load %arg8[%c0_17, %c0_18] : memref<8x128xf32, #tpu.memory_space<vmem>>, vector<8x128xf32>
    tpu.vector_store %arg8[%c0_17, %c0_18], %21 {strides = array<i32>} : memref<8x128xf32, #tpu.memory_space<vmem>>, vector<8x128xf32>,
    return
  }
  func.func @transform_0(%arg0: i32) -> (i32, i32) {
    %c0_i32 = arith.constant 0 : i32
    %c0_i32_0 = arith.constant 0 : i32
    return %arg0, %c0_i32 : i32, i32
  }
  func.func @transform_1(%arg0: i32) -> (i32, i32) {
    %c0_i32 = arith.constant 0 : i32
    %c0_i32_0 = arith.constant 0 : i32
    %c0_i32_1 = arith.constant 0 : i32
    return %c0_i32, %c0_i32_0 : i32, i32
  }
  func.func @transform_2(%arg0: i32) -> (i32, i32) {
    %c0_i32 = arith.constant 0 : i32
    %c0_i32_0 = arith.constant 0 : i32
    %c0_i32_1 = arith.constant 0 : i32
    return %c0_i32, %c0_i32_0 : i32, i32
  }
  func.func @transform_3(%arg0: i32) -> (i32, i32) {
    %c0_i32 = arith.constant 0 : i32
    %c0_i32_0 = arith.constant 0 : i32
    %c0_i32_1 = arith.constant 0 : i32
    return %c0_i32, %c0_i32_0 : i32, i32
  }
  func.func @transform_4(%arg0: i32) -> (i32, i32) {
    %c0_i32 = arith.constant 0 : i32
    %c0_i32_0 = arith.constant 0 : i32
    %c0_i32_1 = arith.constant 0 : i32
    return %c0_i32, %c0_i32_0 : i32, i32
  }
  func.func @transform_5(%arg0: i32) -> (i32, i32) {
    %c0_i32 = arith.constant 0 : i32
    %c0_i32_0 = arith.constant 0 : i32
    %c0_i32_1 = arith.constant 0 : i32
    return %c0_i32, %c0_i32_0 : i32, i32
  }
  func.func @transform_6(%arg0: i32) -> (i32, i32) {
    %c0_i32 = arith.constant 0 : i32
    %c0_i32_0 = arith.constant 0 : i32
    %c0_i32_1 = arith.constant 0 : i32
    return %c0_i32, %c0_i32_0 : i32, i32
  }
  func.func @transform_7(%arg0: i32) -> (i32, i32) {
    %c0_i32 = arith.constant 0 : i32
    %c0_i32_0 = arith.constant 0 : i32
    return %arg0, %c0_i32 : i32, i32
  }
}

</mosaic_0001>

<llo_original>
// kernel: net_forward.1
$region0: #{net_forward.1}
  #allocation0 [shape = 'u32[]', space=smem, size = 0x4, offset = 0x4, fixed_abs, tag = 'smem constant byte address 0x4 - core index']
  #allocation1 [shape = 'u32[72,128]{1,0:T(1,128)}', space=vmem, size = 0x9000, scoped, tag = 'internal scratch']
  %s0 = inlined_call_operand.vmem [shape: f32[8,8], index: 0, kind: input, shape index: {}]
  %s1 = inlined_call_operand.vmem [shape: f32[8,128], index: 1, kind: input, shape index: {}]
  %s2 = inlined_call_operand.vmem [shape: f32[1,128], index: 2, kind: input, shape index: {}]
  %s3 = inlined_call_operand.hbm [shape: bf16[128,128], index: 3, kind: input, shape index: {}]
  %s4 = inlined_call_operand.vmem [shape: f32[1,128], index: 4, kind: input, shape index: {}]
  %s5 = inlined_call_operand.hbm [shape: bf16[128,128], index: 5, kind: input, shape index: {}]
  %s6 = inlined_call_operand.vmem [shape: f32[1,128], index: 6, kind: input, shape index: {}]
  %s7 = inlined_call_operand.vmem [shape: f32[8,128], index: 7, kind: output, shape index: {}]
  %s8 = sld [smem:[#allocation0]]
  $region46: #{net_forward.1} parent=0
    _
  %s10 = ssub.s32 1, %s8
  %s11 = scalar_select 0, %s10, %s8
  $region1: #{net_forward.1} parent=0
    #allocation2 [shape = 'u8[32768]{0}', space=vmem, size = 0x8000, scoped, tag = 'input window, operand 3, single buffered']
    #allocation3 [shape = 's32[1]{0}', space=sflag, size = 0x4, scoped, tag = 'scoped memory for net_forward.1']
    #allocation4 [shape = 'u8[32768]{0}', space=vmem, size = 0x8000, scoped, tag = 'input window, operand 5, single buffered']
    #allocation5 [shape = 's32[1]{0}', space=sflag, size = 0x4, scoped, tag = 'scoped memory for net_forward.1']
    %12 = vsyncpa [#allocation3], 0
    %13 = vsyncpa [#allocation5], 0
    // Predicated region
    $region2: #{net_forward.1} parent=1 // pred_check
      _
    $region3: #{net_forward.1} parent=1 // pred_check_branch
      %15 = sbr.rel (0) target = $region5
    $region4: #{net_forward.1} parent=1 // pred_region
      _
    $region5: #{net_forward.1} parent=1 // pred_fallthru
      _
    // Predicated region
    $region6: #{net_forward.1} parent=1 // pred_check
      _
    $region7: #{net_forward.1} parent=1 // pred_check_branch
      %17 = sbr.rel (0) target = $region9
    $region8: #{net_forward.1} parent=1 // pred_region
      _
    $region9: #{net_forward.1} parent=1 // pred_fallthru
      _
    // Predicated region
    $region10: #{net_forward.1} parent=1 // pred_check
      _
    $region11: #{net_forward.1} parent=1 // pred_check_branch
      %19 = sbr.rel (0) target = $region13
    $region12: #{net_forward.1} parent=1 // pred_region
      _
    $region13: #{net_forward.1} parent=1 // pred_fallthru
      _
    // Predicated region
    $region14: #{net_forward.1} parent=1 // pred_check
      _
    $region15: #{net_forward.1} parent=1 // pred_check_branch
      %21 = sbr.rel (0) target = $region17
    $region16: #{net_forward.1} parent=1 // pred_region
      %23 = vsyncadd [#allocation3], 0
      %s24 = sshll.u32 %s3, 4
      %s25 = int_to_ptr.hbm [resolvable:$true] %s24
      %s26 = sshll.u32 [#allocation2], 4
      %s27 = int_to_ptr.vmem [resolvable:$true] %s26
      %32 = dma.hbm_to_vmem [thread:$0]  %s25, 1024, %s27, [#allocation3], 64, 64, 4
    $region17: #{net_forward.1} parent=1 // pred_fallthru
      _
    // Predicated region
    $region18: #{net_forward.1} parent=1 // pred_check
      _
    $region19: #{net_forward.1} parent=1 // pred_check_branch
      %34 = sbr.rel (0) target = $region21
    $region20: #{net_forward.1} parent=1 // pred_region
      _
    $region21: #{net_forward.1} parent=1 // pred_fallthru
      _
    // Predicated region
    $region22: #{net_forward.1} parent=1 // pred_check
      _
    $region23: #{net_forward.1} parent=1 // pred_check_branch
      %36 = sbr.rel (0) target = $region25
    $region24: #{net_forward.1} parent=1 // pred_region
      %38 = vsyncadd [#allocation5], 0
      %s39 = sshll.u32 %s5, 4
      %s40 = int_to_ptr.hbm [resolvable:$true] %s39
      %s41 = sshll.u32 [#allocation4], 4
      %s42 = int_to_ptr.vmem [resolvable:$true] %s41
      %47 = dma.hbm_to_vmem [thread:$0]  %s40, 1024, %s42, [#allocation5], 64, 64, 4
    $region25: #{net_forward.1} parent=1 // pred_fallthru
      _
    // Predicated region
    $region26: #{net_forward.1} parent=1 // pred_check
      _
    $region27: #{net_forward.1} parent=1 // pred_check_branch
      %49 = sbr.rel (0) target = $region29
    $region28: #{net_forward.1} parent=1 // pred_region
      _
    $region29: #{net_forward.1} parent=1 // pred_fallthru
      _
    // Predicated region
    $region30: #{net_forward.1} parent=1 // pred_check
      _
    $region31: #{net_forward.1} parent=1 // pred_check_branch
      %51 = sbr.rel (0) target = $region33
    $region32: #{net_forward.1} parent=1 // pred_region
      %53 = dma.done [#allocation3], 1024
    $region33: #{net_forward.1} parent=1 // pred_fallthru
      _
    // Predicated region
    $region34: #{net_forward.1} parent=1 // pred_check
      _
    $region35: #{net_forward.1} parent=1 // pred_check_branch
      %55 = sbr.rel (0) target = $region37
    $region36: #{net_forward.1} parent=1 // pred_region
      %57 = dma.done [#allocation5], 1024
    $region37: #{net_forward.1} parent=1 // pred_fallthru
      _
    %v58 = vld [vmem:[%s0] sm:$0xff]
    %v59 = vld [vmem:[%s1] sm:$0xff]
    %v60 = vld [vmem:[%s2] sm:$0x1]
    %v62 = vperm.slane %v60, 0
    %vm64 = vcmask 64512
    %v66 = vsel %vm64, %v58, 0
    %68 = vmatpush.msra.mxu0 0.0
    %69 = vmatpush.msra.mxu0 0.0
    %70 = vmatpush.msra.mxu0 0.0
    %71 = vmatpush.msra.mxu0 0.0
    %72 = vmatpush.msra.mxu0 0.0
    %73 = vmatpush.msra.mxu0 0.0
    %74 = vmatpush.msra.mxu0 0.0
    %75 = vmatpush.msra.mxu0 0.0
    %76 = vmatpush.msra.mxu0 0.0
    %77 = vmatpush.msra.mxu0 0.0
    %78 = vmatpush.msra.mxu0 0.0
    %79 = vmatpush.msra.mxu0 0.0
    %80 = vmatpush.msra.mxu0 0.0
    %81 = vmatpush.msra.mxu0 0.0
    %82 = vmatpush.msra.mxu0 0.0
    %83 = vmatpush.msra.mxu0 %v59
    %84 = vmatmul.f32.gmra.mxu0 %v66
    %v85 = vpop.f32.mrf.mxu0
    %v86 = vadd.f32 %v62, %v85
    %87 = vdwg.mxu0
    %v88 = vmax.f32 %v86, 0.0
    %v89 = vpack.c.bf16 %v88, %v88
    %v90 = vld [vmem:[#allocation2] sm:$0xf]
    %v91 = vld [vmem:[#allocation2 + $0x4] sm:$0xf]
    %v92 = vld [vmem:[#allocation2 + $0x8] sm:$0xf]
    %v93 = vld [vmem:[#allocation2 + $0xc] sm:$0xf]
    %v94 = vld [vmem:[#allocation2 + $0x10] sm:$0xf]
    %v95 = vld [vmem:[#allocation2 + $0x14] sm:$0xf]
    %v96 = vld [vmem:[#allocation2 + $0x18] sm:$0xf]
    %v97 = vld [vmem:[#allocation2 + $0x1c] sm:$0xf]
    %v98 = vld [vmem:[#allocation2 + $0x20] sm:$0xf]
    %v99 = vld [vmem:[#allocation2 + $0x24] sm:$0xf]
    %v100 = vld [vmem:[#allocation2 + $0x28] sm:$0xf]
    %v101 = vld [vmem:[#allocation2 + $0x2c] sm:$0xf]
    %v102 = vld [vmem:[#allocation2 + $0x30] sm:$0xf]
    %v103 = vld [vmem:[#allocation2 + $0x34] sm:$0xf]
    %v104 = vld [vmem:[#allocation2 + $0x38] sm:$0xf]
    %v105 = vld [vmem:[#allocation2 + $0x3c] sm:$0xf]
    %v106 = vld [vmem:[%s4] sm:$0x1]
    %v108 = vperm.slane %v106, 0
    %v126 = vunpack.c.l.b16 %v90
    %v127 = vunpack.c.l.b16 %v91
    %v128 = vunpack.c.l.b16 %v92
    %v129 = vunpack.c.l.b16 %v93
    %v130 = vunpack.c.l.b16 %v94
    %v131 = vunpack.c.l.b16 %v95
    %v132 = vunpack.c.l.b16 %v96
    %v133 = vunpack.c.l.b16 %v97
    %v134 = vunpack.c.l.b16 %v98
    %v135 = vunpack.c.l.b16 %v99
    %v136 = vunpack.c.l.b16 %v100
    %v137 = vunpack.c.l.b16 %v101
    %v138 = vunpack.c.l.b16 %v102
    %v139 = vunpack.c.l.b16 %v103
    %v140 = vunpack.c.l.b16 %v104
    %v141 = vunpack.c.l.b16 %v105
    %v142 = vpack.c.b16 %v127, %v126
    %v143 = vpack.c.b16 %v129, %v128
    %v144 = vpack.c.b16 %v131, %v130
    %v145 = vpack.c.b16 %v133, %v132
    %v146 = vpack.c.b16 %v135, %v134
    %v147 = vpack.c.b16 %v137, %v136
    %v148 = vpack.c.b16 %v139, %v138
    %v149 = vpack.c.b16 %v141, %v140
    %158 = vmatpush.bf16.msra.mxu0 %v149
    %159 = vmatpush.bf16.msra.mxu0 %v148
    %160 = vmatpush.bf16.msra.mxu0 %v147
    %161 = vmatpush.bf16.msra.mxu0 %v146
    %162 = vmatpush.bf16.msra.mxu0 %v145
    %163 = vmatpush.bf16.msra.mxu0 %v144
    %164 = vmatpush.bf16.msra.mxu0 %v143
    %165 = vmatpush.bf16.msra.mxu0 %v142
    %166 = vmatmul.bf16.gmra.mxu0 %v89
    %v167 = vpop.f32.mrf.mxu0
    %v168 = vadd.f32 %v108, %v167
    %v169 = vpop.f32.mrf.mxu0
    %170 = vdwg.mxu0
    %v171 = vmax.f32 %v168, 0.0
    %v172 = vpack.c.bf16 %v171, %v171
    %v173 = vld [vmem:[#allocation4] sm:$0xf]
    %v174 = vld [vmem:[#allocation4 + $0x4] sm:$0xf]
    %v175 = vld [vmem:[#allocation4 + $0x8] sm:$0xf]
    %v176 = vld [vmem:[#allocation4 + $0xc] sm:$0xf]
    %v177 = vld [vmem:[#allocation4 + $0x10] sm:$0xf]
    %v178 = vld [vmem:[#allocation4 + $0x14] sm:$0xf]
    %v179 = vld [vmem:[#allocation4 + $0x18] sm:$0xf]
    %v180 = vld [vmem:[#allocation4 + $0x1c] sm:$0xf]
    %v181 = vld [vmem:[#allocation4 + $0x20] sm:$0xf]
    %v182 = vld [vmem:[#allocation4 + $0x24] sm:$0xf]
    %v183 = vld [vmem:[#allocation4 + $0x28] sm:$0xf]
    %v184 = vld [vmem:[#allocation4 + $0x2c] sm:$0xf]
    %v185 = vld [vmem:[#allocation4 + $0x30] sm:$0xf]
    %v186 = vld [vmem:[#allocation4 + $0x34] sm:$0xf]
    %v187 = vld [vmem:[#allocation4 + $0x38] sm:$0xf]
    %v188 = vld [vmem:[#allocation4 + $0x3c] sm:$0xf]
    %v189 = vld [vmem:[%s6] sm:$0x1]
    %v191 = vperm.slane %v189, 0
    %v209 = vunpack.c.l.b16 %v173
    %v210 = vunpack.c.l.b16 %v174
    %v211 = vunpack.c.l.b16 %v175
    %v212 = vunpack.c.l.b16 %v176
    %v213 = vunpack.c.l.b16 %v177
    %v214 = vunpack.c.l.b16 %v178
    %v215 = vunpack.c.l.b16 %v179
    %v216 = vunpack.c.l.b16 %v180
    %v217 = vunpack.c.l.b16 %v181
    %v218 = vunpack.c.l.b16 %v182
    %v219 = vunpack.c.l.b16 %v183
    %v220 = vunpack.c.l.b16 %v184
    %v221 = vunpack.c.l.b16 %v185
    %v222 = vunpack.c.l.b16 %v186
    %v223 = vunpack.c.l.b16 %v187
    %v224 = vunpack.c.l.b16 %v188
    %v225 = vpack.c.b16 %v210, %v209
    %v226 = vpack.c.b16 %v212, %v211
    %v227 = vpack.c.b16 %v214, %v213
    %v228 = vpack.c.b16 %v216, %v215
    %v229 = vpack.c.b16 %v218, %v217
    %v230 = vpack.c.b16 %v220, %v219
    %v231 = vpack.c.b16 %v222, %v221
    %v232 = vpack.c.b16 %v224, %v223
    %241 = vmatpush.bf16.msra.mxu0 %v232
    %242 = vmatpush.bf16.msra.mxu0 %v231
    %243 = vmatpush.bf16.msra.mxu0 %v230
    %244 = vmatpush.bf16.msra.mxu0 %v229
    %245 = vmatpush.bf16.msra.mxu0 %v228
    %246 = vmatpush.bf16.msra.mxu0 %v227
    %247 = vmatpush.bf16.msra.mxu0 %v226
    %248 = vmatpush.bf16.msra.mxu0 %v225
    %249 = vmatmul.bf16.gmra.mxu0 %v172
    %v250 = vpop.f32.mrf.mxu0
    %v251 = vadd.f32 %v191, %v250
    %v252 = vpop.f32.mrf.mxu0
    %253 = vdwg.mxu0
    %254 = vst [vmem:[%s7] sm:$0xff] %v251
    // Predicated region
    $region38: #{net_forward.1} parent=1 // pred_check
      _
    $region39: #{net_forward.1} parent=1 // pred_check_branch
      %256 = sbr.rel (0) target = $region41
    $region40: #{net_forward.1} parent=1 // pred_region
      _
    $region41: #{net_forward.1} parent=1 // pred_fallthru
      _
    // Predicated region
    $region42: #{net_forward.1} parent=1 // pred_check
      _
    $region43: #{net_forward.1} parent=1 // pred_check_branch
      %258 = sbr.rel (0) target = $region45
    $region44: #{net_forward.1} parent=1 // pred_region
      _
    $region45: #{net_forward.1} parent=1 // pred_fallthru
      _
    %259 = vsyncpa [#allocation3], 1
    %260 = vsyncpa [#allocation5], 1

</llo_original>
